<compile_context>
chip_gen: v7x
topology: tpu7x:2x2x1
jax: 0.10.0
libtpu: 0.0.40
codegen_flags: <defaults>
</compile_context>

<pallas_src>
import functools

import jax
import jax.numpy as jnp
from jax import lax
from jax.experimental import pallas as pl
from jax.experimental.pallas import tpu as pltpu

HIDDEN = 256
HEAD_PAD = 128  # lane-dense padded width of the fused actor+critic head


def _round_up(x, m):
    return (x + m - 1) // m * m


def _cdiv(a, b):
    return (a + b - 1) // b


def _actor_critic_kernel(
    x_ref,
    w1_ref, b1_ref,
    w2_ref, b2_ref,
    w3_ref, b3_ref,
    w4_ref, b4_ref,
    wh_ref, bh_ref,
    out_ref,
    *,
    action_dim,
):
    x = x_ref[...]  # [TB, sd_pad] float32

    def linear(h, w_ref, b_ref):
        # Native bf16 MXU matmul: cast the activation at the dot boundary,
        # feed the bf16 weight ref directly; accumulate in f32.
        return (
            jnp.dot(h.astype(jnp.bfloat16), w_ref[...],
                    preferred_element_type=jnp.float32)
            + b_ref[...]
        )

    # Common trunk: 4 x (Linear + ReLU), elementwise kept in f32.
    h = jnp.maximum(linear(x, w1_ref, b1_ref), 0.0)
    h = jnp.maximum(linear(h, w2_ref, b2_ref), 0.0)
    h = jnp.maximum(linear(h, w3_ref, b3_ref), 0.0)
    h = jnp.maximum(linear(h, w4_ref, b4_ref), 0.0)

    # Fused actor+critic head: one MXU pass -> [TB, HEAD_PAD] slab.
    #   columns 0..action_dim-1 : actor logits
    #   column  action_dim      : critic value
    #   columns action_dim+1..  : zero padding (zero weights / zero bias)
    head = linear(h, wh_ref, bh_ref)
    lane = lax.broadcasted_iota(jnp.int32, head.shape, dimension=1)

    # Numerically stable softmax over the actor lanes only.
    # NOTE: neg_big must stay at finfo.min so exp(neg_big - m) flushes to an
    # exact 0.0 in the padded/critic lanes; do NOT soften it (e.g. to -1e9) or
    # the value lane would pick up softmax contamination.
    neg_big = jnp.finfo(jnp.float32).min
    logits = jnp.where(lane < action_dim, head, neg_big)
    m = jnp.max(logits, axis=-1, keepdims=True)
    e = jnp.exp(logits - m)                      # padded lanes -> exactly 0
    denom = jnp.sum(e, axis=-1, keepdims=True)
    # approx=False keeps the tight sum-to-1 guarantee; one reciprocal per tile
    # is negligible either way.
    probs = e * pl.reciprocal(denom, approx=False)

    value_col = jnp.where(lane == action_dim, head, 0.0)

    # Single lane-dense store: probs in lanes [0, A), value in lane A.
    out_ref[...] = (probs + value_col).astype(out_ref.dtype)


@functools.partial(jax.jit,
                   static_argnames=("action_dim", "block_b", "out_dtype"))
def actor_critic_forward(x, params, *, action_dim, block_b=512,
                         out_dtype=jnp.float32):
    """x: [B, state_dim] float32.  params: output of pack_params()."""
    b, state_dim = x.shape
    sd_pad = params["w1"].shape[0]
    assert sd_pad >= state_dim

    # Batch tile: large (amortizes ~0.35us/step overhead + per-step MXU RHS
    # staging), but guarantee >=2 grid steps whenever the batch allows it so
    # v7x's two TensorCores both get work on the "parallel" axis.
    tb = max(8, min(block_b, _round_up(_cdiv(b, 2), 8)))
    b_pad = _round_up(b, tb)

    # One-time host pad: rows to the batch tile, columns to the MXU-aligned
    # padded state_dim (matches the zero-padded rows of w1).
    if b_pad != b or sd_pad != state_dim:
        x = jnp.pad(x, ((0, b_pad - b), (0, sd_pad - state_dim)))

    grid = (b_pad // tb,)

    in_specs = [pl.BlockSpec((tb, sd_pad), lambda i: (i, 0))]
    args = [x]
    for name in ("w1", "b1", "w2", "b2", "w3", "b3", "w4", "b4", "wh", "bh"):
        a = params[name]
        # Constant index_map -> weight/bias blocks stay resident in VMEM.
        in_specs.append(pl.BlockSpec(a.shape, lambda i: (0, 0)))
        args.append(a)

    out = pl.pallas_call(
        functools.partial(_actor_critic_kernel, action_dim=action_dim),
        out_shape=jax.ShapeDtypeStruct((b_pad, HEAD_PAD), out_dtype),
        grid=grid,
        in_specs=in_specs,
        out_specs=pl.BlockSpec((tb, HEAD_PAD), lambda i: (i, 0)),
        compiler_params=pltpu.CompilerParams(
            dimension_semantics=("parallel",)),
    )(*args)

    probs = out[:b, :action_dim]
    value = out[:b, action_dim:action_dim + 1]
    return probs, value


def init_params(key, state_dim, action_dim):
    """nn.Linear-style init (uniform +-1/sqrt(fan_in)); W stored [in, out]."""
    def linear_init(k, fan_in, fan_out):
        kw, kb = jax.random.split(k)
        bound = 1.0 / jnp.sqrt(fan_in)
        w = jax.random.uniform(kw, (fan_in, fan_out), jnp.float32, -bound, bound)
        bias = jax.random.uniform(kb, (1, fan_out), jnp.float32, -bound, bound)
        return w, bias

    keys = jax.random.split(key, 6)
    p = {}
    p["w1"], p["b1"] = linear_init(keys[0], state_dim, HIDDEN)
    p["w2"], p["b2"] = linear_init(keys[1], HIDDEN, HIDDEN)
    p["w3"], p["b3"] = linear_init(keys[2], HIDDEN, HIDDEN)
    p["w4"], p["b4"] = linear_init(keys[3], HIDDEN, HIDDEN)
    p["wa"], p["ba"] = linear_init(keys[4], HIDDEN, action_dim)
    p["wc"], p["bc"] = linear_init(keys[5], HIDDEN, 1)
    return p


def pack_params(raw, action_dim):
    """Kernel-ready params: bf16 weights, K-padded w1, fused lane-padded head."""
    assert action_dim + 1 <= HEAD_PAD
    state_dim = raw["w1"].shape[0]
    sd_pad = max(128, _round_up(state_dim, 128))

    packed = {}
    # Layer 1: zero-pad the input (K) dimension to a lane-aligned 128 multiple.
    w1 = jnp.zeros((sd_pad, HIDDEN), jnp.float32).at[:state_dim, :].set(raw["w1"])
    packed["w1"] = w1.astype(jnp.bfloat16)
    packed["b1"] = raw["b1"].astype(jnp.float32)
    for i in (2, 3, 4):
        packed[f"w{i}"] = raw[f"w{i}"].astype(jnp.bfloat16)
        packed[f"b{i}"] = raw[f"b{i}"].astype(jnp.float32)

    # Fused actor+critic head, lane-padded to HEAD_PAD.
    wh = jnp.zeros((HIDDEN, HEAD_PAD), jnp.float32)
    wh = wh.at[:, :action_dim].set(raw["wa"])
    wh = wh.at[:, action_dim:action_dim + 1].set(raw["wc"])
    bh = jnp.zeros((1, HEAD_PAD), jnp.float32)
    bh = bh.at[:, :action_dim].set(raw["ba"])
    bh = bh.at[:, action_dim:action_dim + 1].set(raw["bc"])
    packed["wh"] = wh.astype(jnp.bfloat16)
    packed["bh"] = bh
    return packed


def _reference_forward(x, packed, action_dim):
    """Pure-JAX reference mirroring the kernel numerics (bf16 MXU inputs,
    f32 accumulation, f32 elementwise)."""
    sd_pad = packed["w1"].shape[0]
    x = jnp.pad(x, ((0, 0), (0, sd_pad - x.shape[1])))
    h = x
    for i in (1, 2, 3, 4):
        z = jnp.dot(h.astype(jnp.bfloat16), packed[f"w{i}"],
                    preferred_element_type=jnp.float32) + packed[f"b{i}"]
        h = jnp.maximum(z, 0.0)
    head = jnp.dot(h.astype(jnp.bfloat16), packed["wh"],
                   preferred_element_type=jnp.float32) + packed["bh"]
    probs = jax.nn.softmax(head[:, :action_dim], axis=-1)
    value = head[:, action_dim:action_dim + 1]
    return probs, value


if __name__ == "__main__":
    # Shapes consistent with the module: observation vector of size 32 and a
    # discrete action space of size 4.
    state_dim = 32
    action_dim = 4

    key = jax.random.PRNGKey(0)
    k_param, k_x1, k_x2 = jax.random.split(key, 3)
    raw = init_params(k_param, state_dim, action_dim)
    params = pack_params(raw, action_dim)

    # --- small batch (single grid step) ---
    x_small = jax.random.normal(k_x1, (8, state_dim), jnp.float32)
    probs, value = actor_critic_forward(x_small, params, action_dim=action_dim)
    jax.block_until_ready((probs, value))

    ref_p, ref_v = _reference_forward(x_small, params, action_dim)
    assert probs.shape == (8, action_dim)
    assert value.shape == (8, 1)
    assert jnp.allclose(probs, ref_p, atol=2e-3, rtol=2e-3)
    assert jnp.allclose(value, ref_v, atol=2e-3, rtol=2e-3)
    assert jnp.allclose(jnp.sum(probs, axis=-1), 1.0, atol=1e-5)

    # --- larger, non-multiple batch: exercises multi-step grid + padding ---
    x_big = jax.random.normal(k_x2, (300, state_dim), jnp.float32)
    probs_b, value_b = actor_critic_forward(
        x_big, params, action_dim=action_dim, block_b=512)
    jax.block_until_ready((probs_b, value_b))

    ref_pb, ref_vb = _reference_forward(x_big, params, action_dim)
    assert probs_b.shape == (300, action_dim)
    assert value_b.shape == (300, 1)
    assert jnp.allclose(probs_b, ref_pb, atol=2e-3, rtol=2e-3)
    assert jnp.allclose(value_b, ref_vb, atol=2e-3, rtol=2e-3)
    assert jnp.allclose(jnp.sum(probs_b, axis=-1), 1.0, atol=1e-5)

    print("KERNEL_OK")
</pallas_src>

<mosaic_0001>
module attributes {stable_mosaic.version = 11 : i64} {
  func.func @_actor_critic_kernel(%arg0: i32, %arg1: memref<8x128xf32, #tpu.memory_space<vmem>>, %arg2: memref<128x256xbf16, #tpu.memory_space<vmem>>, %arg3: memref<1x256xf32, #tpu.memory_space<vmem>>, %arg4: memref<256x256xbf16, #tpu.memory_space<vmem>>, %arg5: memref<1x256xf32, #tpu.memory_space<vmem>>, %arg6: memref<256x256xbf16, #tpu.memory_space<vmem>>, %arg7: memref<1x256xf32, #tpu.memory_space<vmem>>, %arg8: memref<256x256xbf16, #tpu.memory_space<vmem>>, %arg9: memref<1x256xf32, #tpu.memory_space<vmem>>, %arg10: memref<256x128xbf16, #tpu.memory_space<vmem>>, %arg11: memref<1x128xf32, #tpu.memory_space<vmem>>, %arg12: memref<8x128xf32, #tpu.memory_space<vmem>>) attributes {dimension_semantics = [#tpu.dimension_semantics<parallel>], iteration_bounds = array<i64: 1>, scalar_prefetch = 0 : i64, scratch_operands = 0 : i64, tpu.core_type = #tpu.core_type<tc>, window_params = [{transform_indices = @transform_0, window_bounds = array<i64: 8, 128>}, {pipeline_mode = #tpu.pipeline_mode<synchronous>, transform_indices = @transform_1, window_bounds = array<i64: 128, 256>}, {pipeline_mode = #tpu.pipeline_mode<synchronous>, transform_indices = @transform_2, window_bounds = array<i64: 1, 256>}, {pipeline_mode = #tpu.pipeline_mode<synchronous>, transform_indices = @transform_3, window_bounds = array<i64: 256, 256>}, {pipeline_mode = #tpu.pipeline_mode<synchronous>, transform_indices = @transform_4, window_bounds = array<i64: 1, 256>}, {pipeline_mode = #tpu.pipeline_mode<synchronous>, transform_indices = @transform_5, window_bounds = array<i64: 256, 256>}, {pipeline_mode = #tpu.pipeline_mode<synchronous>, transform_indices = @transform_6, window_bounds = array<i64: 1, 256>}, {pipeline_mode = #tpu.pipeline_mode<synchronous>, transform_indices = @transform_7, window_bounds = array<i64: 256, 256>}, {pipeline_mode = #tpu.pipeline_mode<synchronous>, transform_indices = @transform_8, window_bounds = array<i64: 1, 256>}, {pipeline_mode = #tpu.pipeline_mode<synchronous>, transform_indices = @transform_9, window_bounds = array<i64: 256, 128>}, {pipeline_mode = #tpu.pipeline_mode<synchronous>, transform_indices = @transform_10, window_bounds = array<i64: 1, 128>}, {transform_indices = @transform_11, window_bounds = array<i64: 8, 128>}]} {
    %c0 = arith.constant 0 : index
    %c0_0 = arith.constant 0 : index
    %0 = vector.load %arg1[%c0, %c0_0] : memref<8x128xf32, #tpu.memory_space<vmem>>, vector<8x128xf32>
    %1 = arith.truncf %0 : vector<8x128xf32> to vector<8x128xbf16>
    %c0_1 = arith.constant 0 : index
    %c0_2 = arith.constant 0 : index
    %2 = vector.load %arg2[%c0_1, %c0_2] : memref<128x256xbf16, #tpu.memory_space<vmem>>, vector<128x256xbf16>
    %cst = arith.constant dense<0.000000e+00> : vector<8x256xf32>
    %3 = tpu.matmul %1, %2, %cst {dimension_numbers = #tpu.dot_dimension_numbers<[1], [0], [0], [1], [0, 0, 1, 1], [], []>} : vector<8x128xbf16>, vector<128x256xbf16>, vector<8x256xf32> -> vector<8x256xf32>
    %c0_3 = arith.constant 0 : index
    %c0_4 = arith.constant 0 : index
    %4 = vector.load %arg3[%c0_3, %c0_4] : memref<1x256xf32, #tpu.memory_space<vmem>>, vector<1x256xf32>
    %5 = vector.broadcast %4 : vector<1x256xf32> to vector<8x256xf32>
    %6 = arith.addf %3, %5 : vector<8x256xf32>
    %cst_5 = arith.constant 0.000000e+00 : f32
    %7 = vector.broadcast %cst_5 : f32 to vector<8x256xf32>
    %8 = arith.maximumf %6, %7 : vector<8x256xf32>
    %9 = arith.truncf %8 : vector<8x256xf32> to vector<8x256xbf16>
    %c0_6 = arith.constant 0 : index
    %c0_7 = arith.constant 0 : index
    %10 = vector.load %arg4[%c0_6, %c0_7] : memref<256x256xbf16, #tpu.memory_space<vmem>>, vector<256x256xbf16>
    %cst_8 = arith.constant dense<0.000000e+00> : vector<8x256xf32>
    %11 = tpu.matmul %9, %10, %cst_8 {dimension_numbers = #tpu.dot_dimension_numbers<[1], [0], [0], [1], [0, 0, 1, 1], [], []>} : vector<8x256xbf16>, vector<256x256xbf16>, vector<8x256xf32> -> vector<8x256xf32>
    %c0_9 = arith.constant 0 : index
    %c0_10 = arith.constant 0 : index
    %12 = vector.load %arg5[%c0_9, %c0_10] : memref<1x256xf32, #tpu.memory_space<vmem>>, vector<1x256xf32>
    %13 = vector.broadcast %12 : vector<1x256xf32> to vector<8x256xf32>
    %14 = arith.addf %11, %13 : vector<8x256xf32>
    %cst_11 = arith.constant 0.000000e+00 : f32
    %15 = vector.broadcast %cst_11 : f32 to vector<8x256xf32>
    %16 = arith.maximumf %14, %15 : vector<8x256xf32>
    %17 = arith.truncf %16 : vector<8x256xf32> to vector<8x256xbf16>
    %c0_12 = arith.constant 0 : index
    %c0_13 = arith.constant 0 : index
    %18 = vector.load %arg6[%c0_12, %c0_13] : memref<256x256xbf16, #tpu.memory_space<vmem>>, vector<256x256xbf16>
    %cst_14 = arith.constant dense<0.000000e+00> : vector<8x256xf32>
    %19 = tpu.matmul %17, %18, %cst_14 {dimension_numbers = #tpu.dot_dimension_numbers<[1], [0], [0], [1], [0, 0, 1, 1], [], []>} : vector<8x256xbf16>, vector<256x256xbf16>, vector<8x256xf32> -> vector<8x256xf32>
    %c0_15 = arith.constant 0 : index
    %c0_16 = arith.constant 0 : index
    %20 = vector.load %arg7[%c0_15, %c0_16] : memref<1x256xf32, #tpu.memory_space<vmem>>, vector<1x256xf32>
    %21 = vector.broadcast %20 : vector<1x256xf32> to vector<8x256xf32>
    %22 = arith.addf %19, %21 : vector<8x256xf32>
    %cst_17 = arith.constant 0.000000e+00 : f32
    %23 = vector.broadcast %cst_17 : f32 to vector<8x256xf32>
    %24 = arith.maximumf %22, %23 : vector<8x256xf32>
    %25 = arith.truncf %24 : vector<8x256xf32> to vector<8x256xbf16>
    %c0_18 = arith.constant 0 : index
    %c0_19 = arith.constant 0 : index
    %26 = vector.load %arg8[%c0_18, %c0_19] : memref<256x256xbf16, #tpu.memory_space<vmem>>, vector<256x256xbf16>
    %cst_20 = arith.constant dense<0.000000e+00> : vector<8x256xf32>
    %27 = tpu.matmul %25, %26, %cst_20 {dimension_numbers = #tpu.dot_dimension_numbers<[1], [0], [0], [1], [0, 0, 1, 1], [], []>} : vector<8x256xbf16>, vector<256x256xbf16>, vector<8x256xf32> -> vector<8x256xf32>
    %c0_21 = arith.constant 0 : index
    %c0_22 = arith.constant 0 : index
    %28 = vector.load %arg9[%c0_21, %c0_22] : memref<1x256xf32, #tpu.memory_space<vmem>>, vector<1x256xf32>
    %29 = vector.broadcast %28 : vector<1x256xf32> to vector<8x256xf32>
    %30 = arith.addf %27, %29 : vector<8x256xf32>
    %cst_23 = arith.constant 0.000000e+00 : f32
    %31 = vector.broadcast %cst_23 : f32 to vector<8x256xf32>
    %32 = arith.maximumf %30, %31 : vector<8x256xf32>
    %33 = arith.truncf %32 : vector<8x256xf32> to vector<8x256xbf16>
    %c0_24 = arith.constant 0 : index
    %c0_25 = arith.constant 0 : index
    %34 = vector.load %arg10[%c0_24, %c0_25] : memref<256x128xbf16, #tpu.memory_space<vmem>>, vector<256x128xbf16>
    %cst_26 = arith.constant dense<0.000000e+00> : vector<8x128xf32>
    %35 = tpu.matmul %33, %34, %cst_26 {dimension_numbers = #tpu.dot_dimension_numbers<[1], [0], [0], [1], [0, 0, 1, 1], [], []>} : vector<8x256xbf16>, vector<256x128xbf16>, vector<8x128xf32> -> vector<8x128xf32>
    %c0_27 = arith.constant 0 : index
    %c0_28 = arith.constant 0 : index
    %36 = vector.load %arg11[%c0_27, %c0_28] : memref<1x128xf32, #tpu.memory_space<vmem>>, vector<1x128xf32>
    %37 = vector.broadcast %36 : vector<1x128xf32> to vector<8x128xf32>
    %38 = arith.addf %35, %37 : vector<8x128xf32>
    %39 = tpu.iota {dimensions = array<i32: 1>} : vector<8x128xi32>
    %c4_i32 = arith.constant 4 : i32
    %40 = vector.broadcast %c4_i32 : i32 to vector<8x128xi32>
    %41 = arith.cmpi slt, %39, %40 : vector<8x128xi32>
    %cst_29 = arith.constant -3.40282347E+38 : f32
    %42 = vector.broadcast %cst_29 : f32 to vector<8x128xf32>
    %43 = arith.select %41, %38, %42 : vector<8x128xi1>, vector<8x128xf32>
    %cst_30 = arith.constant dense<0xFF800000> : vector<8xf32>
    %44 = vector.multi_reduction <maximumf>, %43, %cst_30 [1] : vector<8x128xf32> to vector<8xf32>
    %45 = vector.shape_cast %44 : vector<8xf32> to vector<8x1xf32>
    %46 = vector.broadcast %45 : vector<8x1xf32> to vector<8x128xf32>
    %47 = arith.subf %43, %46 : vector<8x128xf32>
    %48 = math.exp %47 : vector<8x128xf32>
    %cst_31 = arith.constant dense<0.000000e+00> : vector<8xf32>
    %49 = vector.multi_reduction <add>, %48, %cst_31 [1] : vector<8x128xf32> to vector<8xf32>
    %50 = vector.shape_cast %49 : vector<8xf32> to vector<8x1xf32>
    %51 = tpu.reciprocal %50 : vector<8x1xf32> -> vector<8x1xf32>
    %52 = vector.broadcast %51 : vector<8x1xf32> to vector<8x128xf32>
    %53 = arith.mulf %48, %52 : vector<8x128xf32>
    %c4_i32_32 = arith.constant 4 : i32
    %54 = vector.broadcast %c4_i32_32 : i32 to vector<8x128xi32>
    %55 = arith.cmpi eq, %39, %54 : vector<8x128xi32>
    %cst_33 = arith.constant 0.000000e+00 : f32
    %56 = vector.broadcast %cst_33 : f32 to vector<8x128xf32>
    %57 = arith.select %55, %38, %56 : vector<8x128xi1>, vector<8x128xf32>
    %58 = arith.addf %53, %57 : vector<8x128xf32>
    %c0_34 = arith.constant 0 : index
    %c0_35 = arith.constant 0 : index
    %59 = vector.load %arg12[%c0_34, %c0_35] : memref<8x128xf32, #tpu.memory_space<vmem>>, vector<8x128xf32>
    tpu.vector_store %arg12[%c0_34, %c0_35], %58 {strides = array<i32>} : memref<8x128xf32, #tpu.memory_space<vmem>>, vector<8x128xf32>,
    return
  }
  func.func @transform_0(%arg0: i32) -> (i32, i32) {
    %c0_i32 = arith.constant 0 : i32
    %c0_i32_0 = arith.constant 0 : i32
    return %arg0, %c0_i32 : i32, i32
  }
  func.func @transform_1(%arg0: i32) -> (i32, i32) {
    %c0_i32 = arith.constant 0 : i32
    %c0_i32_0 = arith.constant 0 : i32
    %c0_i32_1 = arith.constant 0 : i32
    return %c0_i32, %c0_i32_0 : i32, i32
  }
  func.func @transform_2(%arg0: i32) -> (i32, i32) {
    %c0_i32 = arith.constant 0 : i32
    %c0_i32_0 = arith.constant 0 : i32
    %c0_i32_1 = arith.constant 0 : i32
    return %c0_i32, %c0_i32_0 : i32, i32
  }
  func.func @transform_3(%arg0: i32) -> (i32, i32) {
    %c0_i32 = arith.constant 0 : i32
    %c0_i32_0 = arith.constant 0 : i32
    %c0_i32_1 = arith.constant 0 : i32
    return %c0_i32, %c0_i32_0 : i32, i32
  }
  func.func @transform_4(%arg0: i32) -> (i32, i32) {
    %c0_i32 = arith.constant 0 : i32
    %c0_i32_0 = arith.constant 0 : i32
    %c0_i32_1 = arith.constant 0 : i32
    return %c0_i32, %c0_i32_0 : i32, i32
  }
  func.func @transform_5(%arg0: i32) -> (i32, i32) {
    %c0_i32 = arith.constant 0 : i32
    %c0_i32_0 = arith.constant 0 : i32
    %c0_i32_1 = arith.constant 0 : i32
    return %c0_i32, %c0_i32_0 : i32, i32
  }
  func.func @transform_6(%arg0: i32) -> (i32, i32) {
    %c0_i32 = arith.constant 0 : i32
    %c0_i32_0 = arith.constant 0 : i32
    %c0_i32_1 = arith.constant 0 : i32
    return %c0_i32, %c0_i32_0 : i32, i32
  }
  func.func @transform_7(%arg0: i32) -> (i32, i32) {
    %c0_i32 = arith.constant 0 : i32
    %c0_i32_0 = arith.constant 0 : i32
    %c0_i32_1 = arith.constant 0 : i32
    return %c0_i32, %c0_i32_0 : i32, i32
  }
  func.func @transform_8(%arg0: i32) -> (i32, i32) {
    %c0_i32 = arith.constant 0 : i32
    %c0_i32_0 = arith.constant 0 : i32
    %c0_i32_1 = arith.constant 0 : i32
    return %c0_i32, %c0_i32_0 : i32, i32
  }
  func.func @transform_9(%arg0: i32) -> (i32, i32) {
    %c0_i32 = arith.constant 0 : i32
    %c0_i32_0 = arith.constant 0 : i32
    %c0_i32_1 = arith.constant 0 : i32
    return %c0_i32, %c0_i32_0 : i32, i32
  }
  func.func @transform_10(%arg0: i32) -> (i32, i32) {
    %c0_i32 = arith.constant 0 : i32
    %c0_i32_0 = arith.constant 0 : i32
    %c0_i32_1 = arith.constant 0 : i32
    return %c0_i32, %c0_i32_0 : i32, i32
  }
  func.func @transform_11(%arg0: i32) -> (i32, i32) {
    %c0_i32 = arith.constant 0 : i32
    %c0_i32_0 = arith.constant 0 : i32
    return %arg0, %c0_i32 : i32, i32
  }
}

</mosaic_0001>

<llo_original>
// kernel: actor_critic_forward.1
$region0: #{actor_critic_forward.1}
  #allocation0 [shape = 'u32[]', space=smem, size = 0x4, offset = 0x4, fixed_abs, tag = 'smem constant byte address 0x4 - core index']
  #allocation1 [shape = 'u32[144,128]{1,0:T(1,128)}', space=vmem, size = 0x12000, scoped, tag = 'internal scratch']
  %s0 = inlined_call_operand.vmem [shape: f32[8,128], index: 0, kind: input, shape index: {}]
  %s1 = inlined_call_operand.hbm [shape: bf16[128,256], index: 1, kind: input, shape index: {}]
  %s2 = inlined_call_operand.vmem [shape: f32[1,256], index: 2, kind: input, shape index: {}]
  %s3 = inlined_call_operand.hbm [shape: bf16[256,256], index: 3, kind: input, shape index: {}]
  %s4 = inlined_call_operand.vmem [shape: f32[1,256], index: 4, kind: input, shape index: {}]
  %s5 = inlined_call_operand.hbm [shape: bf16[256,256], index: 5, kind: input, shape index: {}]
  %s6 = inlined_call_operand.vmem [shape: f32[1,256], index: 6, kind: input, shape index: {}]
  %s7 = inlined_call_operand.hbm [shape: bf16[256,256], index: 7, kind: input, shape index: {}]
  %s8 = inlined_call_operand.vmem [shape: f32[1,256], index: 8, kind: input, shape index: {}]
  %s9 = inlined_call_operand.hbm [shape: bf16[256,128], index: 9, kind: input, shape index: {}]
  %s10 = inlined_call_operand.vmem [shape: f32[1,128], index: 10, kind: input, shape index: {}]
  %s11 = inlined_call_operand.vmem [shape: f32[8,128], index: 11, kind: output, shape index: {}]
  %s12 = sld [smem:[#allocation0]]
  $region74: #{actor_critic_forward.1} parent=0
    _
  %s14 = ssub.s32 1, %s12
  %s15 = scalar_select 0, %s14, %s12
  $region1: #{actor_critic_forward.1} parent=0
    #allocation2 [shape = 'u8[65536]{0}', space=vmem, size = 0x10000, scoped, tag = 'input window, operand 1, single buffered']
    #allocation3 [shape = 's32[1]{0}', space=sflag, size = 0x4, scoped, tag = 'scoped memory for actor_critic_forward.1']
    #allocation4 [shape = 'u8[131072]{0}', space=vmem, size = 0x20000, scoped, tag = 'input window, operand 3, single buffered']
    #allocation5 [shape = 's32[1]{0}', space=sflag, size = 0x4, scoped, tag = 'scoped memory for actor_critic_forward.1']
    #allocation6 [shape = 'u8[131072]{0}', space=vmem, size = 0x20000, scoped, tag = 'input window, operand 5, single buffered']
    #allocation7 [shape = 'u8[131072]{0}', space=vmem, size = 0x20000, scoped, tag = 'input window, operand 7, single buffered']
    #allocation8 [shape = 's32[1]{0}', space=sflag, size = 0x4, scoped, tag = 'scoped memory for actor_critic_forward.1']
    #allocation9 [shape = 'u8[65536]{0}', space=vmem, size = 0x10000, scoped, tag = 'input window, operand 9, single buffered']
    %16 = vsyncpa [#allocation3], 0
    %17 = vsyncpa [#allocation5], 0
    %18 = vsyncpa [#allocation8], 0
    // Predicated region
    $region2: #{actor_critic_forward.1} parent=1 // pred_check
      _
    $region3: #{actor_critic_forward.1} parent=1 // pred_check_branch
      %20 = sbr.rel (0) target = $region5
    $region4: #{actor_critic_forward.1} parent=1 // pred_region
      _
    $region5: #{actor_critic_forward.1} parent=1 // pred_fallthru
      _
    // Predicated region
    $region6: #{actor_critic_forward.1} parent=1 // pred_check
      _
    $region7: #{actor_critic_forward.1} parent=1 // pred_check_branch
      %22 = sbr.rel (0) target = $region9
    $region8: #{actor_critic_forward.1} parent=1 // pred_region
      %s24 = ssub.s32 2048, 2048
      %25 = vsyncadd [#allocation3], %s24
      %s26 = sshll.u32 [#allocation2], 4
      %s27 = int_to_ptr.vmem [resolvable:$true] %s26
      %32 = dma.hbm_to_vmem [thread:$0]  %s1, 2048, %s27, [#allocation3], 128, 128, 8
    $region9: #{actor_critic_forward.1} parent=1 // pred_fallthru
      _
    // Predicated region
    $region10: #{actor_critic_forward.1} parent=1 // pred_check
      _
    $region11: #{actor_critic_forward.1} parent=1 // pred_check_branch
      %34 = sbr.rel (0) target = $region13
    $region12: #{actor_critic_forward.1} parent=1 // pred_region
      _
    $region13: #{actor_critic_forward.1} parent=1 // pred_fallthru
      _
    // Predicated region
    $region14: #{actor_critic_forward.1} parent=1 // pred_check
      _
    $region15: #{actor_critic_forward.1} parent=1 // pred_check_branch
      %36 = sbr.rel (0) target = $region17
    $region16: #{actor_critic_forward.1} parent=1 // pred_region
      %s38 = ssub.s32 4096, 4096
      %39 = vsyncadd [#allocation5], %s38
      %s40 = sshll.u32 [#allocation4], 4
      %s41 = int_to_ptr.vmem [resolvable:$true] %s40
      %46 = dma.hbm_to_vmem [thread:$0]  %s3, 4096, %s41, [#allocation5], 128, 128, 8
    $region17: #{actor_critic_forward.1} parent=1 // pred_fallthru
      _
    // Predicated region
    $region18: #{actor_critic_forward.1} parent=1 // pred_check
      _
    $region19: #{actor_critic_forward.1} parent=1 // pred_check_branch
      %48 = sbr.rel (0) target = $region21
    $region20: #{actor_critic_forward.1} parent=1 // pred_region
      _
    $region21: #{actor_critic_forward.1} parent=1 // pred_fallthru
      _
    // Predicated region
    $region22: #{actor_critic_forward.1} parent=1 // pred_check
      _
    $region23: #{actor_critic_forward.1} parent=1 // pred_check_branch
      %50 = sbr.rel (0) target = $region25
    $region24: #{actor_critic_forward.1} parent=1 // pred_region
      %s52 = ssub.s32 4096, 4096
      %53 = vsyncadd [#allocation5], %s52
      %s54 = sshll.u32 [#allocation6], 4
      %s55 = int_to_ptr.vmem [resolvable:$true] %s54
      %60 = dma.hbm_to_vmem [thread:$0]  %s5, 4096, %s55, [#allocation5], 128, 128, 8
    $region25: #{actor_critic_forward.1} parent=1 // pred_fallthru
      _
    // Predicated region
    $region26: #{actor_critic_forward.1} parent=1 // pred_check
      _
    $region27: #{actor_critic_forward.1} parent=1 // pred_check_branch
      %62 = sbr.rel (0) target = $region29
    $region28: #{actor_critic_forward.1} parent=1 // pred_region
      _
    $region29: #{actor_critic_forward.1} parent=1 // pred_fallthru
      _
    // Predicated region
    $region30: #{actor_critic_forward.1} parent=1 // pred_check
      _
    $region31: #{actor_critic_forward.1} parent=1 // pred_check_branch
      %64 = sbr.rel (0) target = $region33
    $region32: #{actor_critic_forward.1} parent=1 // pred_region
      %s66 = ssub.s32 4096, 4096
      %67 = vsyncadd [#allocation8], %s66
      %s68 = sshll.u32 [#allocation7], 4
      %s69 = int_to_ptr.vmem [resolvable:$true] %s68
      %74 = dma.hbm_to_vmem [thread:$0]  %s7, 4096, %s69, [#allocation8], 128, 128, 8
    $region33: #{actor_critic_forward.1} parent=1 // pred_fallthru
      _
    // Predicated region
    $region34: #{actor_critic_forward.1} parent=1 // pred_check
      _
    $region35: #{actor_critic_forward.1} parent=1 // pred_check_branch
      %76 = sbr.rel (0) target = $region37
    $region36: #{actor_critic_forward.1} parent=1 // pred_region
      _
    $region37: #{actor_critic_forward.1} parent=1 // pred_fallthru
      _
    // Predicated region
    $region38: #{actor_critic_forward.1} parent=1 // pred_check
      _
    $region39: #{actor_critic_forward.1} parent=1 // pred_check_branch
      %78 = sbr.rel (0) target = $region41
    $region40: #{actor_critic_forward.1} parent=1 // pred_region
      %s80 = ssub.s32 2048, 2048
      %81 = vsyncadd [#allocation8], %s80
      %s82 = sshll.u32 [#allocation9], 4
      %s83 = int_to_ptr.vmem [resolvable:$true] %s82
      %88 = dma.hbm_to_vmem [thread:$0]  %s9, 2048, %s83, [#allocation8], 64, 64, 4
    $region41: #{actor_critic_forward.1} parent=1 // pred_fallthru
      _
    // Predicated region
    $region42: #{actor_critic_forward.1} parent=1 // pred_check
      _
    $region43: #{actor_critic_forward.1} parent=1 // pred_check_branch
      %90 = sbr.rel (0) target = $region45
    $region44: #{actor_critic_forward.1} parent=1 // pred_region
      _
    $region45: #{actor_critic_forward.1} parent=1 // pred_fallthru
      _
    // Predicated region
    $region46: #{actor_critic_forward.1} parent=1 // pred_check
      _
    $region47: #{actor_critic_forward.1} parent=1 // pred_check_branch
      %92 = sbr.rel (0) target = $region49
    $region48: #{actor_critic_forward.1} parent=1 // pred_region
      %93 = dma.done [#allocation3], 2048
    $region49: #{actor_critic_forward.1} parent=1 // pred_fallthru
      _
    // Predicated region
    $region50: #{actor_critic_forward.1} parent=1 // pred_check
      _
    $region51: #{actor_critic_forward.1} parent=1 // pred_check_branch
      %95 = sbr.rel (0) target = $region53
    $region52: #{actor_critic_forward.1} parent=1 // pred_region
      %96 = dma.done [#allocation5], 4096
    $region53: #{actor_critic_forward.1} parent=1 // pred_fallthru
      _
    // Predicated region
    $region54: #{actor_critic_forward.1} parent=1 // pred_check
      _
    $region55: #{actor_critic_forward.1} parent=1 // pred_check_branch
      %98 = sbr.rel (0) target = $region57
    $region56: #{actor_critic_forward.1} parent=1 // pred_region
      %99 = dma.done [#allocation5], 4096
    $region57: #{actor_critic_forward.1} parent=1 // pred_fallthru
      _
    // Predicated region
    $region58: #{actor_critic_forward.1} parent=1 // pred_check
      _
    $region59: #{actor_critic_forward.1} parent=1 // pred_check_branch
      %101 = sbr.rel (0) target = $region61
    $region60: #{actor_critic_forward.1} parent=1 // pred_region
      %102 = dma.done [#allocation8], 4096
    $region61: #{actor_critic_forward.1} parent=1 // pred_fallthru
      _
    // Predicated region
    $region62: #{actor_critic_forward.1} parent=1 // pred_check
      _
    $region63: #{actor_critic_forward.1} parent=1 // pred_check_branch
      %104 = sbr.rel (0) target = $region65
    $region64: #{actor_critic_forward.1} parent=1 // pred_region
      %105 = dma.done [#allocation8], 2048
    $region65: #{actor_critic_forward.1} parent=1 // pred_fallthru
      _
    %v107 = vld [vmem:[%s0] sm:$0xff]
    %v108 = vpack.c.bf16 %v107, %v107
    %v109 = vld [vmem:[#allocation2] sm:$0xff]
    %v110 = vld [vmem:[#allocation2 + $0x8] sm:$0xff]
    %v111 = vld [vmem:[#allocation2 + $0x10] sm:$0xff]
    %v112 = vld [vmem:[#allocation2 + $0x18] sm:$0xff]
    %v113 = vld [vmem:[#allocation2 + $0x20] sm:$0xff]
    %v114 = vld [vmem:[#allocation2 + $0x28] sm:$0xff]
    %v115 = vld [vmem:[#allocation2 + $0x30] sm:$0xff]
    %v116 = vld [vmem:[#allocation2 + $0x38] sm:$0xff]
    %v117 = vld [vmem:[#allocation2 + $0x40] sm:$0xff]
    %v118 = vld [vmem:[#allocation2 + $0x48] sm:$0xff]
    %v119 = vld [vmem:[#allocation2 + $0x50] sm:$0xff]
    %v120 = vld [vmem:[#allocation2 + $0x58] sm:$0xff]
    %v121 = vld [vmem:[#allocation2 + $0x60] sm:$0xff]
    %v122 = vld [vmem:[#allocation2 + $0x68] sm:$0xff]
    %v123 = vld [vmem:[#allocation2 + $0x70] sm:$0xff]
    %v124 = vld [vmem:[#allocation2 + $0x78] sm:$0xff]
    %v125 = vld [vmem:[%s2] sm:$0x3]
    %v127 = vlaneseq
    %v128 = vshrl.u32 %v127, 7
    %v129 = vsub.s32 0, %v128
    %v130 = vrot.slane %v125, %v129
    %v131 = vlaneseq
    %v132 = vshrl.u32 %v131, 7
    %v133 = vsub.s32 1, %v132
    %v134 = vrot.slane %v125, %v133
    %v153 = vunpack.c.l.b16 %v109
    %v154 = vunpack.c.h.b16 %v109
    %v155 = vunpack.c.l.b16 %v110
    %v156 = vunpack.c.h.b16 %v110
    %v157 = vunpack.c.l.b16 %v111
    %v158 = vunpack.c.h.b16 %v111
    %v159 = vunpack.c.l.b16 %v112
    %v160 = vunpack.c.h.b16 %v112
    %v161 = vunpack.c.l.b16 %v113
    %v162 = vunpack.c.h.b16 %v113
    %v163 = vunpack.c.l.b16 %v114
    %v164 = vunpack.c.h.b16 %v114
    %v165 = vunpack.c.l.b16 %v115
    %v166 = vunpack.c.h.b16 %v115
    %v167 = vunpack.c.l.b16 %v116
    %v168 = vunpack.c.h.b16 %v116
    %v169 = vunpack.c.l.b16 %v117
    %v170 = vunpack.c.h.b16 %v117
    %v171 = vunpack.c.l.b16 %v118
    %v172 = vunpack.c.h.b16 %v118
    %v173 = vunpack.c.l.b16 %v119
    %v174 = vunpack.c.h.b16 %v119
    %v175 = vunpack.c.l.b16 %v120
    %v176 = vunpack.c.h.b16 %v120
    %v177 = vunpack.c.l.b16 %v121
    %v178 = vunpack.c.h.b16 %v121
    %v179 = vunpack.c.l.b16 %v122
    %v180 = vunpack.c.h.b16 %v122
    %v181 = vunpack.c.l.b16 %v123
    %v182 = vunpack.c.h.b16 %v123
    %v183 = vunpack.c.l.b16 %v124
    %v184 = vunpack.c.h.b16 %v124
    %v185 = vpack.c.b16 %v155, %v153
    %v186 = vpack.c.b16 %v156, %v154
    %v187 = vpack.c.b16 %v159, %v157
    %v188 = vpack.c.b16 %v160, %v158
    %v189 = vpack.c.b16 %v163, %v161
    %v190 = vpack.c.b16 %v164, %v162
    %v191 = vpack.c.b16 %v167, %v165
    %v192 = vpack.c.b16 %v168, %v166
    %v193 = vpack.c.b16 %v171, %v169
    %v194 = vpack.c.b16 %v172, %v170
    %v195 = vpack.c.b16 %v175, %v173
    %v196 = vpack.c.b16 %v176, %v174
    %v197 = vpack.c.b16 %v179, %v177
    %v198 = vpack.c.b16 %v180, %v178
    %v199 = vpack.c.b16 %v183, %v181
    %v200 = vpack.c.b16 %v184, %v182
    %217 = vmatprep.subr.bf16.mxu0 %v186
    %218 = vmatpush1.bf16.msra.mxu0 %v185
    %219 = vmatprep.subr.bf16.mxu0 %v188
    %220 = vmatpush1.bf16.msra.mxu0 %v187
    %221 = vmatprep.subr.bf16.mxu0 %v190
    %222 = vmatpush1.bf16.msra.mxu0 %v189
    %223 = vmatprep.subr.bf16.mxu0 %v192
    %224 = vmatpush1.bf16.msra.mxu0 %v191
    %225 = vmatprep.subr.bf16.mxu0 %v194
    %226 = vmatpush1.bf16.msra.mxu0 %v193
    %227 = vmatprep.subr.bf16.mxu0 %v196
    %228 = vmatpush1.bf16.msra.mxu0 %v195
    %229 = vmatprep.subr.bf16.mxu0 %v198
    %230 = vmatpush1.bf16.msra.mxu0 %v197
    %231 = vmatprep.subr.bf16.mxu0 %v200
    %232 = vmatpush1.bf16.msra.mxu0 %v199
    %233 = vmatprep.subr.bf16.mxu0 0
    %234 = vmatpush1.bf16.msra.mxu0 0
    %235 = vmatprep.subr.bf16.mxu0 0
    %236 = vmatpush1.bf16.msra.mxu0 0
    %237 = vmatprep.subr.bf16.mxu0 0
    %238 = vmatpush1.bf16.msra.mxu0 0
    %239 = vmatprep.subr.bf16.mxu0 0
    %240 = vmatpush1.bf16.msra.mxu0 0
    %241 = vmatprep.subr.bf16.mxu0 0
    %242 = vmatpush1.bf16.msra.mxu0 0
    %243 = vmatprep.subr.bf16.mxu0 0
    %244 = vmatpush1.bf16.msra.mxu0 0
    %245 = vmatprep.subr.bf16.mxu0 0
    %246 = vmatpush1.bf16.msra.mxu0 0
    %247 = vmatprep.subr.bf16.mxu0 0
    %248 = vmatpush1.bf16.msra.mxu0 0
    %249 = vmatprep.mubr.bf16.mxu0 0
    %250 = vmatmul.mubr.bf16.gmra.mrb[0].mxu0 %v108
    %v251 = vpop.f32.mrb[0].mxu0
    %v252 = vadd.f32 %v130, %v251
    %v253 = vpop.f32.mrb[0].mxu0
    %v254 = vadd.f32 %v134, %v253
    %v255 = vpop.f32.mrb[0].mxu0
    %v256 = vpop.f32.mrb[0].mxu0
    %257 = vdwg.mxu0
    %v258 = vmax.f32 %v252, 0.0
    %v259 = vmax.f32 %v254, 0.0
    %v260 = vpack.c.bf16 %v258, %v258
    %v261 = vpack.c.bf16 %v259, %v259
    %v262 = vld [vmem:[#allocation4] sm:$0xff]
    %v263 = vld [vmem:[#allocation4 + $0x8] sm:$0xff]
    %v264 = vld [vmem:[#allocation4 + $0x10] sm:$0xff]
    %v265 = vld [vmem:[#allocation4 + $0x18] sm:$0xff]
    %v266 = vld [vmem:[#allocation4 + $0x20] sm:$0xff]
    %v267 = vld [vmem:[#allocation4 + $0x28] sm:$0xff]
    %v268 = vld [vmem:[#allocation4 + $0x30] sm:$0xff]
    %v269 = vld [vmem:[#allocation4 + $0x38] sm:$0xff]
    %v270 = vld [vmem:[#allocation4 + $0x40] sm:$0xff]
    %v271 = vld [vmem:[#allocation4 + $0x48] sm:$0xff]
    %v272 = vld [vmem:[#allocation4 + $0x50] sm:$0xff]
    %v273 = vld [vmem:[#allocation4 + $0x58] sm:$0xff]
    %v274 = vld [vmem:[#allocation4 + $0x60] sm:$0xff]
    %v275 = vld [vmem:[#allocation4 + $0x68] sm:$0xff]
    %v276 = vld [vmem:[#allocation4 + $0x70] sm:$0xff]
    %v277 = vld [vmem:[#allocation4 + $0x78] sm:$0xff]
    %v278 = vld [vmem:[#allocation4 + $0x80] sm:$0xff]
    %v279 = vld [vmem:[#allocation4 + $0x88] sm:$0xff]
    %v280 = vld [vmem:[#allocation4 + $0x90] sm:$0xff]
    %v281 = vld [vmem:[#allocation4 + $0x98] sm:$0xff]
    %v282 = vld [vmem:[#allocation4 + $0xa0] sm:$0xff]
    %v283 = vld [vmem:[#allocation4 + $0xa8] sm:$0xff]
    %v284 = vld [vmem:[#allocation4 + $0xb0] sm:$0xff]
    %v285 = vld [vmem:[#allocation4 + $0xb8] sm:$0xff]
    %v286 = vld [vmem:[#allocation4 + $0xc0] sm:$0xff]
    %v287 = vld [vmem:[#allocation4 + $0xc8] sm:$0xff]
    %v288 = vld [vmem:[#allocation4 + $0xd0] sm:$0xff]
    %v289 = vld [vmem:[#allocation4 + $0xd8] sm:$0xff]
    %v290 = vld [vmem:[#allocation4 + $0xe0] sm:$0xff]
    %v291 = vld [vmem:[#allocation4 + $0xe8] sm:$0xff]
    %v292 = vld [vmem:[#allocation4 + $0xf0] sm:$0xff]
    %v293 = vld [vmem:[#allocation4 + $0xf8] sm:$0xff]
    %v294 = vld [vmem:[%s4] sm:$0x3]
    %v296 = vlaneseq
    %v297 = vshrl.u32 %v296, 7
    %v298 = vsub.s32 0, %v297
    %v299 = vrot.slane %v294, %v298
    %v300 = vlaneseq
    %v301 = vshrl.u32 %v300, 7
    %v302 = vsub.s32 1, %v301
    %v303 = vrot.slane %v294, %v302
    %v338 = vunpack.c.l.b16 %v262
    %v339 = vunpack.c.h.b16 %v262
    %v340 = vunpack.c.l.b16 %v263
    %v341 = vunpack.c.h.b16 %v263
    %v342 = vunpack.c.l.b16 %v264
    %v343 = vunpack.c.h.b16 %v264
    %v344 = vunpack.c.l.b16 %v265
    %v345 = vunpack.c.h.b16 %v265
    %v346 = vunpack.c.l.b16 %v266
    %v347 = vunpack.c.h.b16 %v266
    %v348 = vunpack.c.l.b16 %v267
    %v349 = vunpack.c.h.b16 %v267
    %v350 = vunpack.c.l.b16 %v268
    %v351 = vunpack.c.h.b16 %v268
    %v352 = vunpack.c.l.b16 %v269
    %v353 = vunpack.c.h.b16 %v269
    %v354 = vunpack.c.l.b16 %v270
    %v355 = vunpack.c.h.b16 %v270
    %v356 = vunpack.c.l.b16 %v271
    %v357 = vunpack.c.h.b16 %v271
    %v358 = vunpack.c.l.b16 %v272
    %v359 = vunpack.c.h.b16 %v272
    %v360 = vunpack.c.l.b16 %v273
    %v361 = vunpack.c.h.b16 %v273
    %v362 = vunpack.c.l.b16 %v274
    %v363 = vunpack.c.h.b16 %v274
    %v364 = vunpack.c.l.b16 %v275
    %v365 = vunpack.c.h.b16 %v275
    %v366 = vunpack.c.l.b16 %v276
    %v367 = vunpack.c.h.b16 %v276
    %v368 = vunpack.c.l.b16 %v277
    %v369 = vunpack.c.h.b16 %v277
    %v370 = vunpack.c.l.b16 %v278
    %v371 = vunpack.c.h.b16 %v278
    %v372 = vunpack.c.l.b16 %v279
    %v373 = vunpack.c.h.b16 %v279
    %v374 = vunpack.c.l.b16 %v280
    %v375 = vunpack.c.h.b16 %v280
    %v376 = vunpack.c.l.b16 %v281
    %v377 = vunpack.c.h.b16 %v281
    %v378 = vunpack.c.l.b16 %v282
    %v379 = vunpack.c.h.b16 %v282
    %v380 = vunpack.c.l.b16 %v283
    %v381 = vunpack.c.h.b16 %v283
    %v382 = vunpack.c.l.b16 %v284
    %v383 = vunpack.c.h.b16 %v284
    %v384 = vunpack.c.l.b16 %v285
    %v385 = vunpack.c.h.b16 %v285
    %v386 = vunpack.c.l.b16 %v286
    %v387 = vunpack.c.h.b16 %v286
    %v388 = vunpack.c.l.b16 %v287
    %v389 = vunpack.c.h.b16 %v287
    %v390 = vunpack.c.l.b16 %v288
    %v391 = vunpack.c.h.b16 %v288
    %v392 = vunpack.c.l.b16 %v289
    %v393 = vunpack.c.h.b16 %v289
    %v394 = vunpack.c.l.b16 %v290
    %v395 = vunpack.c.h.b16 %v290
    %v396 = vunpack.c.l.b16 %v291
    %v397 = vunpack.c.h.b16 %v291
    %v398 = vunpack.c.l.b16 %v292
    %v399 = vunpack.c.h.b16 %v292
    %v400 = vunpack.c.l.b16 %v293
    %v401 = vunpack.c.h.b16 %v293
    %v402 = vpack.c.b16 %v340, %v338
    %v403 = vpack.c.b16 %v341, %v339
    %v404 = vpack.c.b16 %v344, %v342
    %v405 = vpack.c.b16 %v345, %v343
    %v406 = vpack.c.b16 %v348, %v346
    %v407 = vpack.c.b16 %v349, %v347
    %v408 = vpack.c.b16 %v352, %v350
    %v409 = vpack.c.b16 %v353, %v351
    %v410 = vpack.c.b16 %v356, %v354
    %v411 = vpack.c.b16 %v357, %v355
    %v412 = vpack.c.b16 %v360, %v358
    %v413 = vpack.c.b16 %v361, %v359
    %v414 = vpack.c.b16 %v364, %v362
    %v415 = vpack.c.b16 %v365, %v363
    %v416 = vpack.c.b16 %v368, %v366
    %v417 = vpack.c.b16 %v369, %v367
    %v418 = vpack.c.b16 %v372, %v370
    %v419 = vpack.c.b16 %v373, %v371
    %v420 = vpack.c.b16 %v376, %v374
    %v421 = vpack.c.b16 %v377, %v375
    %v422 = vpack.c.b16 %v380, %v378
    %v423 = vpack.c.b16 %v381, %v379
    %v424 = vpack.c.b16 %v384, %v382
    %v425 = vpack.c.b16 %v385, %v383
    %v426 = vpack.c.b16 %v388, %v386
    %v427 = vpack.c.b16 %v389, %v387
    %v428 = vpack.c.b16 %v392, %v390
    %v429 = vpack.c.b16 %v393, %v391
    %v430 = vpack.c.b16 %v396, %v394
    %v431 = vpack.c.b16 %v397, %v395
    %v432 = vpack.c.b16 %v400, %v398
    %v433 = vpack.c.b16 %v401, %v399
    %466 = vmatprep.subr.bf16.mxu0 %v403
    %467 = vmatpush1.bf16.msra.mxu0 %v402
    %468 = vmatprep.subr.bf16.mxu0 %v405
    %469 = vmatpush1.bf16.msra.mxu0 %v404
    %470 = vmatprep.subr.bf16.mxu0 %v407
    %471 = vmatpush1.bf16.msra.mxu0 %v406
    %472 = vmatprep.subr.bf16.mxu0 %v409
    %473 = vmatpush1.bf16.msra.mxu0 %v408
    %474 = vmatprep.subr.bf16.mxu0 %v411
    %475 = vmatpush1.bf16.msra.mxu0 %v410
    %476 = vmatprep.subr.bf16.mxu0 %v413
    %477 = vmatpush1.bf16.msra.mxu0 %v412
    %478 = vmatprep.subr.bf16.mxu0 %v415
    %479 = vmatpush1.bf16.msra.mxu0 %v414
    %480 = vmatprep.subr.bf16.mxu0 %v417
    %481 = vmatpush1.bf16.msra.mxu0 %v416
    %482 = vmatprep.subr.bf16.mxu0 %v419
    %483 = vmatpush1.bf16.msra.mxu0 %v418
    %484 = vmatprep.subr.bf16.mxu0 %v421
    %485 = vmatpush1.bf16.msra.mxu0 %v420
    %486 = vmatprep.subr.bf16.mxu0 %v423
    %487 = vmatpush1.bf16.msra.mxu0 %v422
    %488 = vmatprep.subr.bf16.mxu0 %v425
    %489 = vmatpush1.bf16.msra.mxu0 %v424
    %490 = vmatprep.subr.bf16.mxu0 %v427
    %491 = vmatpush1.bf16.msra.mxu0 %v426
    %492 = vmatprep.subr.bf16.mxu0 %v429
    %493 = vmatpush1.bf16.msra.mxu0 %v428
    %494 = vmatprep.subr.bf16.mxu0 %v431
    %495 = vmatpush1.bf16.msra.mxu0 %v430
    %496 = vmatprep.subr.bf16.mxu0 %v433
    %497 = vmatpush1.bf16.msra.mxu0 %v432
    %498 = vmatprep.mubr.bf16.mxu0 %v261
    %499 = vmatmul.mubr.bf16.gmra.mrb[0].mxu0 %v260
    %v500 = vpop.f32.mrb[0].mxu0
    %v501 = vadd.f32 %v299, %v500
    %v502 = vpop.f32.mrb[0].mxu0
    %v503 = vadd.f32 %v303, %v502
    %v504 = vpop.f32.mrb[0].mxu0
    %v505 = vpop.f32.mrb[0].mxu0
    %506 = vdwg.mxu0
    %v507 = vmax.f32 %v501, 0.0
    %v508 = vmax.f32 %v503, 0.0
    %v509 = vpack.c.bf16 %v507, %v507
    %v510 = vpack.c.bf16 %v508, %v508
    %v511 = vld [vmem:[#allocation6] sm:$0xff]
    %v512 = vld [vmem:[#allocation6 + $0x8] sm:$0xff]
    %v513 = vld [vmem:[#allocation6 + $0x10] sm:$0xff]
    %v514 = vld [vmem:[#allocation6 + $0x18] sm:$0xff]
    %v515 = vld [vmem:[#allocation6 + $0x20] sm:$0xff]
    %v516 = vld [vmem:[#allocation6 + $0x28] sm:$0xff]
    %v517 = vld [vmem:[#allocation6 + $0x30] sm:$0xff]
    %v518 = vld [vmem:[#allocation6 + $0x38] sm:$0xff]
    %v519 = vld [vmem:[#allocation6 + $0x40] sm:$0xff]
    %v520 = vld [vmem:[#allocation6 + $0x48] sm:$0xff]
    %v521 = vld [vmem:[#allocation6 + $0x50] sm:$0xff]
    %v522 = vld [vmem:[#allocation6 + $0x58] sm:$0xff]
    %v523 = vld [vmem:[#allocation6 + $0x60] sm:$0xff]
    %v524 = vld [vmem:[#allocation6 + $0x68] sm:$0xff]
    %v525 = vld [vmem:[#allocation6 + $0x70] sm:$0xff]
    %v526 = vld [vmem:[#allocation6 + $0x78] sm:$0xff]
    %v527 = vld [vmem:[#allocation6 + $0x80] sm:$0xff]
    %v528 = vld [vmem:[#allocation6 + $0x88] sm:$0xff]
    %v529 = vld [vmem:[#allocation6 + $0x90] sm:$0xff]
    %v530 = vld [vmem:[#allocation6 + $0x98] sm:$0xff]
    %v531 = vld [vmem:[#allocation6 + $0xa0] sm:$0xff]
    %v532 = vld [vmem:[#allocation6 + $0xa8] sm:$0xff]
    %v533 = vld [vmem:[#allocation6 + $0xb0] sm:$0xff]
    %v534 = vld [vmem:[#allocation6 + $0xb8] sm:$0xff]
    %v535 = vld [vmem:[#allocation6 + $0xc0] sm:$0xff]
    %v536 = vld [vmem:[#allocation6 + $0xc8] sm:$0xff]
    %v537 = vld [vmem:[#allocation6 + $0xd0] sm:$0xff]
    %v538 = vld [vmem:[#allocation6 + $0xd8] sm:$0xff]
    %v539 = vld [vmem:[#allocation6 + $0xe0] sm:$0xff]
    %v540 = vld [vmem:[#allocation6 + $0xe8] sm:$0xff]
    %v541 = vld [vmem:[#allocation6 + $0xf0] sm:$0xff]
    %v542 = vld [vmem:[#allocation6 + $0xf8] sm:$0xff]
    %v543 = vld [vmem:[%s6] sm:$0x3]
    %v545 = vlaneseq
    %v546 = vshrl.u32 %v545, 7
    %v547 = vsub.s32 0, %v546
    %v548 = vrot.slane %v543, %v547
    %v549 = vlaneseq
    %v550 = vshrl.u32 %v549, 7
    %v551 = vsub.s32 1, %v550
    %v552 = vrot.slane %v543, %v551
    %v587 = vunpack.c.l.b16 %v511
    %v588 = vunpack.c.h.b16 %v511
    %v589 = vunpack.c.l.b16 %v512
    %v590 = vunpack.c.h.b16 %v512
    %v591 = vunpack.c.l.b16 %v513
    %v592 = vunpack.c.h.b16 %v513
    %v593 = vunpack.c.l.b16 %v514
    %v594 = vunpack.c.h.b16 %v514
    %v595 = vunpack.c.l.b16 %v515
    %v596 = vunpack.c.h.b16 %v515
    %v597 = vunpack.c.l.b16 %v516
    %v598 = vunpack.c.h.b16 %v516
    %v599 = vunpack.c.l.b16 %v517
    %v600 = vunpack.c.h.b16 %v517
    %v601 = vunpack.c.l.b16 %v518
    %v602 = vunpack.c.h.b16 %v518
    %v603 = vunpack.c.l.b16 %v519
    %v604 = vunpack.c.h.b16 %v519
    %v605 = vunpack.c.l.b16 %v520
    %v606 = vunpack.c.h.b16 %v520
    %v607 = vunpack.c.l.b16 %v521
    %v608 = vunpack.c.h.b16 %v521
    %v609 = vunpack.c.l.b16 %v522
    %v610 = vunpack.c.h.b16 %v522
    %v611 = vunpack.c.l.b16 %v523
    %v612 = vunpack.c.h.b16 %v523
    %v613 = vunpack.c.l.b16 %v524
    %v614 = vunpack.c.h.b16 %v524
    %v615 = vunpack.c.l.b16 %v525
    %v616 = vunpack.c.h.b16 %v525
    %v617 = vunpack.c.l.b16 %v526
    %v618 = vunpack.c.h.b16 %v526
    %v619 = vunpack.c.l.b16 %v527
    %v620 = vunpack.c.h.b16 %v527
    %v621 = vunpack.c.l.b16 %v528
    %v622 = vunpack.c.h.b16 %v528
    %v623 = vunpack.c.l.b16 %v529
    %v624 = vunpack.c.h.b16 %v529
    %v625 = vunpack.c.l.b16 %v530
    %v626 = vunpack.c.h.b16 %v530
    %v627 = vunpack.c.l.b16 %v531
    %v628 = vunpack.c.h.b16 %v531
    %v629 = vunpack.c.l.b16 %v532
    %v630 = vunpack.c.h.b16 %v532
    %v631 = vunpack.c.l.b16 %v533
    %v632 = vunpack.c.h.b16 %v533
    %v633 = vunpack.c.l.b16 %v534
    %v634 = vunpack.c.h.b16 %v534
    %v635 = vunpack.c.l.b16 %v535
    %v636 = vunpack.c.h.b16 %v535
    %v637 = vunpack.c.l.b16 %v536
    %v638 = vunpack.c.h.b16 %v536
    %v639 = vunpack.c.l.b16 %v537
    %v640 = vunpack.c.h.b16 %v537
    %v641 = vunpack.c.l.b16 %v538
    %v642 = vunpack.c.h.b16 %v538
    %v643 = vunpack.c.l.b16 %v539
    %v644 = vunpack.c.h.b16 %v539
    %v645 = vunpack.c.l.b16 %v540
    %v646 = vunpack.c.h.b16 %v540
    %v647 = vunpack.c.l.b16 %v541
    %v648 = vunpack.c.h.b16 %v541
    %v649 = vunpack.c.l.b16 %v542
    %v650 = vunpack.c.h.b16 %v542
    %v651 = vpack.c.b16 %v589, %v587
    %v652 = vpack.c.b16 %v590, %v588
    %v653 = vpack.c.b16 %v593, %v591
    %v654 = vpack.c.b16 %v594, %v592
    %v655 = vpack.c.b16 %v597, %v595
    %v656 = vpack.c.b16 %v598, %v596
    %v657 = vpack.c.b16 %v601, %v599
    %v658 = vpack.c.b16 %v602, %v600
    %v659 = vpack.c.b16 %v605, %v603
    %v660 = vpack.c.b16 %v606, %v604
    %v661 = vpack.c.b16 %v609, %v607
    %v662 = vpack.c.b16 %v610, %v608
    %v663 = vpack.c.b16 %v613, %v611
    %v664 = vpack.c.b16 %v614, %v612
    %v665 = vpack.c.b16 %v617, %v615
    %v666 = vpack.c.b16 %v618, %v616
    %v667 = vpack.c.b16 %v621, %v619
    %v668 = vpack.c.b16 %v622, %v620
    %v669 = vpack.c.b16 %v625, %v623
    %v670 = vpack.c.b16 %v626, %v624
    %v671 = vpack.c.b16 %v629, %v627
    %v672 = vpack.c.b16 %v630, %v628
    %v673 = vpack.c.b16 %v633, %v631
    %v674 = vpack.c.b16 %v634, %v632
    %v675 = vpack.c.b16 %v637, %v635
    %v676 = vpack.c.b16 %v638, %v636
    %v677 = vpack.c.b16 %v641, %v639
    %v678 = vpack.c.b16 %v642, %v640
    %v679 = vpack.c.b16 %v645, %v643
    %v680 = vpack.c.b16 %v646, %v644
    %v681 = vpack.c.b16 %v649, %v647
    %v682 = vpack.c.b16 %v650, %v648
    %715 = vmatprep.subr.bf16.mxu0 %v652
    %716 = vmatpush1.bf16.msra.mxu0 %v651
    %717 = vmatprep.subr.bf16.mxu0 %v654
    %718 = vmatpush1.bf16.msra.mxu0 %v653
    %719 = vmatprep.subr.bf16.mxu0 %v656
    %720 = vmatpush1.bf16.msra.mxu0 %v655
    %721 = vmatprep.subr.bf16.mxu0 %v658
    %722 = vmatpush1.bf16.msra.mxu0 %v657
    %723 = vmatprep.subr.bf16.mxu0 %v660
    %724 = vmatpush1.bf16.msra.mxu0 %v659
    %725 = vmatprep.subr.bf16.mxu0 %v662
    %726 = vmatpush1.bf16.msra.mxu0 %v661
    %727 = vmatprep.subr.bf16.mxu0 %v664
    %728 = vmatpush1.bf16.msra.mxu0 %v663
    %729 = vmatprep.subr.bf16.mxu0 %v666
    %730 = vmatpush1.bf16.msra.mxu0 %v665
    %731 = vmatprep.subr.bf16.mxu0 %v668
    %732 = vmatpush1.bf16.msra.mxu0 %v667
    %733 = vmatprep.subr.bf16.mxu0 %v670
    %734 = vmatpush1.bf16.msra.mxu0 %v669
    %735 = vmatprep.subr.bf16.mxu0 %v672
    %736 = vmatpush1.bf16.msra.mxu0 %v671
    %737 = vmatprep.subr.bf16.mxu0 %v674
    %738 = vmatpush1.bf16.msra.mxu0 %v673
    %739 = vmatprep.subr.bf16.mxu0 %v676
    %740 = vmatpush1.bf16.msra.mxu0 %v675
    %741 = vmatprep.subr.bf16.mxu0 %v678
    %742 = vmatpush1.bf16.msra.mxu0 %v677
    %743 = vmatprep.subr.bf16.mxu0 %v680
    %744 = vmatpush1.bf16.msra.mxu0 %v679
    %745 = vmatprep.subr.bf16.mxu0 %v682
    %746 = vmatpush1.bf16.msra.mxu0 %v681
    %747 = vmatprep.mubr.bf16.mxu0 %v510
    %748 = vmatmul.mubr.bf16.gmra.mrb[0].mxu0 %v509
    %v749 = vpop.f32.mrb[0].mxu0
    %v750 = vadd.f32 %v548, %v749
    %v751 = vpop.f32.mrb[0].mxu0
    %v752 = vadd.f32 %v552, %v751
    %v753 = vpop.f32.mrb[0].mxu0
    %v754 = vpop.f32.mrb[0].mxu0
    %755 = vdwg.mxu0
    %v756 = vmax.f32 %v750, 0.0
    %v757 = vmax.f32 %v752, 0.0
    %v758 = vpack.c.bf16 %v756, %v756
    %v759 = vpack.c.bf16 %v757, %v757
    %v760 = vld [vmem:[#allocation7] sm:$0xff]
    %v761 = vld [vmem:[#allocation7 + $0x8] sm:$0xff]
    %v762 = vld [vmem:[#allocation7 + $0x10] sm:$0xff]
    %v763 = vld [vmem:[#allocation7 + $0x18] sm:$0xff]
    %v764 = vld [vmem:[#allocation7 + $0x20] sm:$0xff]
    %v765 = vld [vmem:[#allocation7 + $0x28] sm:$0xff]
    %v766 = vld [vmem:[#allocation7 + $0x30] sm:$0xff]
    %v767 = vld [vmem:[#allocation7 + $0x38] sm:$0xff]
    %v768 = vld [vmem:[#allocation7 + $0x40] sm:$0xff]
    %v769 = vld [vmem:[#allocation7 + $0x48] sm:$0xff]
    %v770 = vld [vmem:[#allocation7 + $0x50] sm:$0xff]
    %v771 = vld [vmem:[#allocation7 + $0x58] sm:$0xff]
    %v772 = vld [vmem:[#allocation7 + $0x60] sm:$0xff]
    %v773 = vld [vmem:[#allocation7 + $0x68] sm:$0xff]
    %v774 = vld [vmem:[#allocation7 + $0x70] sm:$0xff]
    %v775 = vld [vmem:[#allocation7 + $0x78] sm:$0xff]
    %v776 = vld [vmem:[#allocation7 + $0x80] sm:$0xff]
    %v777 = vld [vmem:[#allocation7 + $0x88] sm:$0xff]
    %v778 = vld [vmem:[#allocation7 + $0x90] sm:$0xff]
    %v779 = vld [vmem:[#allocation7 + $0x98] sm:$0xff]
    %v780 = vld [vmem:[#allocation7 + $0xa0] sm:$0xff]
    %v781 = vld [vmem:[#allocation7 + $0xa8] sm:$0xff]
    %v782 = vld [vmem:[#allocation7 + $0xb0] sm:$0xff]
    %v783 = vld [vmem:[#allocation7 + $0xb8] sm:$0xff]
    %v784 = vld [vmem:[#allocation7 + $0xc0] sm:$0xff]
    %v785 = vld [vmem:[#allocation7 + $0xc8] sm:$0xff]
    %v786 = vld [vmem:[#allocation7 + $0xd0] sm:$0xff]
    %v787 = vld [vmem:[#allocation7 + $0xd8] sm:$0xff]
    %v788 = vld [vmem:[#allocation7 + $0xe0] sm:$0xff]
    %v789 = vld [vmem:[#allocation7 + $0xe8] sm:$0xff]
    %v790 = vld [vmem:[#allocation7 + $0xf0] sm:$0xff]
    %v791 = vld [vmem:[#allocation7 + $0xf8] sm:$0xff]
    %v792 = vld [vmem:[%s8] sm:$0x3]
    %v794 = vlaneseq
    %v795 = vshrl.u32 %v794, 7
    %v796 = vsub.s32 0, %v795
    %v797 = vrot.slane %v792, %v796
    %v798 = vlaneseq
    %v799 = vshrl.u32 %v798, 7
    %v800 = vsub.s32 1, %v799
    %v801 = vrot.slane %v792, %v800
    %v836 = vunpack.c.l.b16 %v760
    %v837 = vunpack.c.h.b16 %v760
    %v838 = vunpack.c.l.b16 %v761
    %v839 = vunpack.c.h.b16 %v761
    %v840 = vunpack.c.l.b16 %v762
    %v841 = vunpack.c.h.b16 %v762
    %v842 = vunpack.c.l.b16 %v763
    %v843 = vunpack.c.h.b16 %v763
    %v844 = vunpack.c.l.b16 %v764
    %v845 = vunpack.c.h.b16 %v764
    %v846 = vunpack.c.l.b16 %v765
    %v847 = vunpack.c.h.b16 %v765
    %v848 = vunpack.c.l.b16 %v766
    %v849 = vunpack.c.h.b16 %v766
    %v850 = vunpack.c.l.b16 %v767
    %v851 = vunpack.c.h.b16 %v767
    %v852 = vunpack.c.l.b16 %v768
    %v853 = vunpack.c.h.b16 %v768
    %v854 = vunpack.c.l.b16 %v769
    %v855 = vunpack.c.h.b16 %v769
    %v856 = vunpack.c.l.b16 %v770
    %v857 = vunpack.c.h.b16 %v770
    %v858 = vunpack.c.l.b16 %v771
    %v859 = vunpack.c.h.b16 %v771
    %v860 = vunpack.c.l.b16 %v772
    %v861 = vunpack.c.h.b16 %v772
    %v862 = vunpack.c.l.b16 %v773
    %v863 = vunpack.c.h.b16 %v773
    %v864 = vunpack.c.l.b16 %v774
    %v865 = vunpack.c.h.b16 %v774
    %v866 = vunpack.c.l.b16 %v775
    %v867 = vunpack.c.h.b16 %v775
    %v868 = vunpack.c.l.b16 %v776
    %v869 = vunpack.c.h.b16 %v776
    %v870 = vunpack.c.l.b16 %v777
    %v871 = vunpack.c.h.b16 %v777
    %v872 = vunpack.c.l.b16 %v778
    %v873 = vunpack.c.h.b16 %v778
    %v874 = vunpack.c.l.b16 %v779
    %v875 = vunpack.c.h.b16 %v779
    %v876 = vunpack.c.l.b16 %v780
    %v877 = vunpack.c.h.b16 %v780
    %v878 = vunpack.c.l.b16 %v781
    %v879 = vunpack.c.h.b16 %v781
    %v880 = vunpack.c.l.b16 %v782
    %v881 = vunpack.c.h.b16 %v782
    %v882 = vunpack.c.l.b16 %v783
    %v883 = vunpack.c.h.b16 %v783
    %v884 = vunpack.c.l.b16 %v784
    %v885 = vunpack.c.h.b16 %v784
    %v886 = vunpack.c.l.b16 %v785
    %v887 = vunpack.c.h.b16 %v785
    %v888 = vunpack.c.l.b16 %v786
    %v889 = vunpack.c.h.b16 %v786
    %v890 = vunpack.c.l.b16 %v787
    %v891 = vunpack.c.h.b16 %v787
    %v892 = vunpack.c.l.b16 %v788
    %v893 = vunpack.c.h.b16 %v788
    %v894 = vunpack.c.l.b16 %v789
    %v895 = vunpack.c.h.b16 %v789
    %v896 = vunpack.c.l.b16 %v790
    %v897 = vunpack.c.h.b16 %v790
    %v898 = vunpack.c.l.b16 %v791
    %v899 = vunpack.c.h.b16 %v791
    %v900 = vpack.c.b16 %v838, %v836
    %v901 = vpack.c.b16 %v839, %v837
    %v902 = vpack.c.b16 %v842, %v840
    %v903 = vpack.c.b16 %v843, %v841
    %v904 = vpack.c.b16 %v846, %v844
    %v905 = vpack.c.b16 %v847, %v845
    %v906 = vpack.c.b16 %v850, %v848
    %v907 = vpack.c.b16 %v851, %v849
    %v908 = vpack.c.b16 %v854, %v852
    %v909 = vpack.c.b16 %v855, %v853
    %v910 = vpack.c.b16 %v858, %v856
    %v911 = vpack.c.b16 %v859, %v857
    %v912 = vpack.c.b16 %v862, %v860
    %v913 = vpack.c.b16 %v863, %v861
    %v914 = vpack.c.b16 %v866, %v864
    %v915 = vpack.c.b16 %v867, %v865
    %v916 = vpack.c.b16 %v870, %v868
    %v917 = vpack.c.b16 %v871, %v869
    %v918 = vpack.c.b16 %v874, %v872
    %v919 = vpack.c.b16 %v875, %v873
    %v920 = vpack.c.b16 %v878, %v876
    %v921 = vpack.c.b16 %v879, %v877
    %v922 = vpack.c.b16 %v882, %v880
    %v923 = vpack.c.b16 %v883, %v881
    %v924 = vpack.c.b16 %v886, %v884
    %v925 = vpack.c.b16 %v887, %v885
    %v926 = vpack.c.b16 %v890, %v888
    %v927 = vpack.c.b16 %v891, %v889
    %v928 = vpack.c.b16 %v894, %v892
    %v929 = vpack.c.b16 %v895, %v893
    %v930 = vpack.c.b16 %v898, %v896
    %v931 = vpack.c.b16 %v899, %v897
    %964 = vmatprep.subr.bf16.mxu0 %v901
    %965 = vmatpush1.bf16.msra.mxu0 %v900
    %966 = vmatprep.subr.bf16.mxu0 %v903
    %967 = vmatpush1.bf16.msra.mxu0 %v902
    %968 = vmatprep.subr.bf16.mxu0 %v905
    %969 = vmatpush1.bf16.msra.mxu0 %v904
    %970 = vmatprep.subr.bf16.mxu0 %v907
    %971 = vmatpush1.bf16.msra.mxu0 %v906
    %972 = vmatprep.subr.bf16.mxu0 %v909
    %973 = vmatpush1.bf16.msra.mxu0 %v908
    %974 = vmatprep.subr.bf16.mxu0 %v911
    %975 = vmatpush1.bf16.msra.mxu0 %v910
    %976 = vmatprep.subr.bf16.mxu0 %v913
    %977 = vmatpush1.bf16.msra.mxu0 %v912
    %978 = vmatprep.subr.bf16.mxu0 %v915
    %979 = vmatpush1.bf16.msra.mxu0 %v914
    %980 = vmatprep.subr.bf16.mxu0 %v917
    %981 = vmatpush1.bf16.msra.mxu0 %v916
    %982 = vmatprep.subr.bf16.mxu0 %v919
    %983 = vmatpush1.bf16.msra.mxu0 %v918
    %984 = vmatprep.subr.bf16.mxu0 %v921
    %985 = vmatpush1.bf16.msra.mxu0 %v920
    %986 = vmatprep.subr.bf16.mxu0 %v923
    %987 = vmatpush1.bf16.msra.mxu0 %v922
    %988 = vmatprep.subr.bf16.mxu0 %v925
    %989 = vmatpush1.bf16.msra.mxu0 %v924
    %990 = vmatprep.subr.bf16.mxu0 %v927
    %991 = vmatpush1.bf16.msra.mxu0 %v926
    %992 = vmatprep.subr.bf16.mxu0 %v929
    %993 = vmatpush1.bf16.msra.mxu0 %v928
    %994 = vmatprep.subr.bf16.mxu0 %v931
    %995 = vmatpush1.bf16.msra.mxu0 %v930
    %996 = vmatprep.mubr.bf16.mxu0 %v759
    %997 = vmatmul.mubr.bf16.gmra.mrb[0].mxu0 %v758
    %v998 = vpop.f32.mrb[0].mxu0
    %v999 = vadd.f32 %v797, %v998
    %v1000 = vpop.f32.mrb[0].mxu0
    %v1001 = vadd.f32 %v801, %v1000
    %v1002 = vpop.f32.mrb[0].mxu0
    %v1003 = vpop.f32.mrb[0].mxu0
    %1004 = vdwg.mxu0
    %v1005 = vmax.f32 %v999, 0.0
    %v1006 = vmax.f32 %v1001, 0.0
    %v1007 = vpack.c.bf16 %v1005, %v1005
    %v1008 = vpack.c.bf16 %v1006, %v1006
    %v1009 = vld [vmem:[#allocation9] sm:$0xf]
    %v1010 = vld [vmem:[#allocation9 + $0x4] sm:$0xf]
    %v1011 = vld [vmem:[#allocation9 + $0x8] sm:$0xf]
    %v1012 = vld [vmem:[#allocation9 + $0xc] sm:$0xf]
    %v1013 = vld [vmem:[#allocation9 + $0x10] sm:$0xf]
    %v1014 = vld [vmem:[#allocation9 + $0x14] sm:$0xf]
    %v1015 = vld [vmem:[#allocation9 + $0x18] sm:$0xf]
    %v1016 = vld [vmem:[#allocation9 + $0x1c] sm:$0xf]
    %v1017 = vld [vmem:[#allocation9 + $0x20] sm:$0xf]
    %v1018 = vld [vmem:[#allocation9 + $0x24] sm:$0xf]
    %v1019 = vld [vmem:[#allocation9 + $0x28] sm:$0xf]
    %v1020 = vld [vmem:[#allocation9 + $0x2c] sm:$0xf]
    %v1021 = vld [vmem:[#allocation9 + $0x30] sm:$0xf]
    %v1022 = vld [vmem:[#allocation9 + $0x34] sm:$0xf]
    %v1023 = vld [vmem:[#allocation9 + $0x38] sm:$0xf]
    %v1024 = vld [vmem:[#allocation9 + $0x3c] sm:$0xf]
    %v1025 = vld [vmem:[#allocation9 + $0x40] sm:$0xf]
    %v1026 = vld [vmem:[#allocation9 + $0x44] sm:$0xf]
    %v1027 = vld [vmem:[#allocation9 + $0x48] sm:$0xf]
    %v1028 = vld [vmem:[#allocation9 + $0x4c] sm:$0xf]
    %v1029 = vld [vmem:[#allocation9 + $0x50] sm:$0xf]
    %v1030 = vld [vmem:[#allocation9 + $0x54] sm:$0xf]
    %v1031 = vld [vmem:[#allocation9 + $0x58] sm:$0xf]
    %v1032 = vld [vmem:[#allocation9 + $0x5c] sm:$0xf]
    %v1033 = vld [vmem:[#allocation9 + $0x60] sm:$0xf]
    %v1034 = vld [vmem:[#allocation9 + $0x64] sm:$0xf]
    %v1035 = vld [vmem:[#allocation9 + $0x68] sm:$0xf]
    %v1036 = vld [vmem:[#allocation9 + $0x6c] sm:$0xf]
    %v1037 = vld [vmem:[#allocation9 + $0x70] sm:$0xf]
    %v1038 = vld [vmem:[#allocation9 + $0x74] sm:$0xf]
    %v1039 = vld [vmem:[#allocation9 + $0x78] sm:$0xf]
    %v1040 = vld [vmem:[#allocation9 + $0x7c] sm:$0xf]
    %v1041 = vld [vmem:[%s10] sm:$0x1]
    %v1043 = vlaneseq
    %v1044 = vshrl.u32 %v1043, 7
    %v1045 = vsub.s32 0, %v1044
    %v1046 = vrot.slane %v1041, %v1045
    %v1080 = vunpack.c.l.b16 %v1009
    %v1081 = vunpack.c.l.b16 %v1010
    %v1082 = vunpack.c.l.b16 %v1011
    %v1083 = vunpack.c.l.b16 %v1012
    %v1084 = vunpack.c.l.b16 %v1013
    %v1085 = vunpack.c.l.b16 %v1014
    %v1086 = vunpack.c.l.b16 %v1015
    %v1087 = vunpack.c.l.b16 %v1016
    %v1088 = vunpack.c.l.b16 %v1017
    %v1089 = vunpack.c.l.b16 %v1018
    %v1090 = vunpack.c.l.b16 %v1019
    %v1091 = vunpack.c.l.b16 %v1020
    %v1092 = vunpack.c.l.b16 %v1021
    %v1093 = vunpack.c.l.b16 %v1022
    %v1094 = vunpack.c.l.b16 %v1023
    %v1095 = vunpack.c.l.b16 %v1024
    %v1096 = vunpack.c.l.b16 %v1025
    %v1097 = vunpack.c.l.b16 %v1026
    %v1098 = vunpack.c.l.b16 %v1027
    %v1099 = vunpack.c.l.b16 %v1028
    %v1100 = vunpack.c.l.b16 %v1029
    %v1101 = vunpack.c.l.b16 %v1030
    %v1102 = vunpack.c.l.b16 %v1031
    %v1103 = vunpack.c.l.b16 %v1032
    %v1104 = vunpack.c.l.b16 %v1033
    %v1105 = vunpack.c.l.b16 %v1034
    %v1106 = vunpack.c.l.b16 %v1035
    %v1107 = vunpack.c.l.b16 %v1036
    %v1108 = vunpack.c.l.b16 %v1037
    %v1109 = vunpack.c.l.b16 %v1038
    %v1110 = vunpack.c.l.b16 %v1039
    %v1111 = vunpack.c.l.b16 %v1040
    %v1112 = vpack.c.b16 %v1081, %v1080
    %v1113 = vpack.c.b16 %v1083, %v1082
    %v1114 = vpack.c.b16 %v1085, %v1084
    %v1115 = vpack.c.b16 %v1087, %v1086
    %v1116 = vpack.c.b16 %v1089, %v1088
    %v1117 = vpack.c.b16 %v1091, %v1090
    %v1118 = vpack.c.b16 %v1093, %v1092
    %v1119 = vpack.c.b16 %v1095, %v1094
    %v1120 = vpack.c.b16 %v1097, %v1096
    %v1121 = vpack.c.b16 %v1099, %v1098
    %v1122 = vpack.c.b16 %v1101, %v1100
    %v1123 = vpack.c.b16 %v1103, %v1102
    %v1124 = vpack.c.b16 %v1105, %v1104
    %v1125 = vpack.c.b16 %v1107, %v1106
    %v1126 = vpack.c.b16 %v1109, %v1108
    %v1127 = vpack.c.b16 %v1111, %v1110
    %1144 = vmatprep.subr.bf16.mxu0 0
    %1145 = vmatpush1.bf16.msra.mxu0 %v1112
    %1146 = vmatprep.subr.bf16.mxu0 0
    %1147 = vmatpush1.bf16.msra.mxu0 %v1113
    %1148 = vmatprep.subr.bf16.mxu0 0
    %1149 = vmatpush1.bf16.msra.mxu0 %v1114
    %1150 = vmatprep.subr.bf16.mxu0 0
    %1151 = vmatpush1.bf16.msra.mxu0 %v1115
    %1152 = vmatprep.subr.bf16.mxu0 0
    %1153 = vmatpush1.bf16.msra.mxu0 %v1116
    %1154 = vmatprep.subr.bf16.mxu0 0
    %1155 = vmatpush1.bf16.msra.mxu0 %v1117
    %1156 = vmatprep.subr.bf16.mxu0 0
    %1157 = vmatpush1.bf16.msra.mxu0 %v1118
    %1158 = vmatprep.subr.bf16.mxu0 0
    %1159 = vmatpush1.bf16.msra.mxu0 %v1119
    %1160 = vmatprep.subr.bf16.mxu0 0
    %1161 = vmatpush1.bf16.msra.mxu0 %v1120
    %1162 = vmatprep.subr.bf16.mxu0 0
    %1163 = vmatpush1.bf16.msra.mxu0 %v1121
    %1164 = vmatprep.subr.bf16.mxu0 0
    %1165 = vmatpush1.bf16.msra.mxu0 %v1122
    %1166 = vmatprep.subr.bf16.mxu0 0
    %1167 = vmatpush1.bf16.msra.mxu0 %v1123
    %1168 = vmatprep.subr.bf16.mxu0 0
    %1169 = vmatpush1.bf16.msra.mxu0 %v1124
    %1170 = vmatprep.subr.bf16.mxu0 0
    %1171 = vmatpush1.bf16.msra.mxu0 %v1125
    %1172 = vmatprep.subr.bf16.mxu0 0
    %1173 = vmatpush1.bf16.msra.mxu0 %v1126
    %1174 = vmatprep.subr.bf16.mxu0 0
    %1175 = vmatpush1.bf16.msra.mxu0 %v1127
    %1176 = vmatprep.mubr.bf16.mxu0 %v1008
    %1177 = vmatmul.mubr.bf16.gmra.mrb[0].mxu0 %v1007
    %v1178 = vpop.f32.mrb[0].mxu0
    %v1179 = vadd.f32 %v1046, %v1178
    %v1180 = vpop.f32.mrb[0].mxu0
    %v1181 = vpop.f32.mrb[0].mxu0
    %v1182 = vpop.f32.mrb[0].mxu0
    %1183 = vdwg.mxu0
    %v1184 = vlaneseq
    %v1185 = vand.u32 %v1184, 127
    %vm1186 = vcmp.lt.s32.totalorder %v1185, 4
    %v1187 = vsel %vm1186, %v1179, -3.4028235e+38
    %1188 = vmax.xlane.f32.xlu0 %v1187
    %v1189 = vpop.xlane.xlu0 %1188
    %v1190 = vsub.f32 %v1187, %v1189
    %v1191 = vmul.f32 %v1190, 1.442695
    %v1192 = vpow.pop %v1191
    %1193 = vadd.xlane.f32.xlu0 %v1192
    %v1194 = vpop.xlane.xlu0 %1193
    %v1195 = vrcp.pop %v1194
    %v1196 = vmul.f32 %v1192, %v1195
    %vm1197 = vcmp.eq.s32.totalorder %v1185, 4
    %v1198 = vsel %vm1197, %v1179, 0.0
    %v1199 = vadd.f32 %v1196, %v1198
    %1200 = vst [vmem:[%s11] sm:$0xff] %v1199
    // Predicated region
    $region66: #{actor_critic_forward.1} parent=1 // pred_check
      _
    $region67: #{actor_critic_forward.1} parent=1 // pred_check_branch
      %1202 = sbr.rel (0) target = $region69
    $region68: #{actor_critic_forward.1} parent=1 // pred_region
      _
    $region69: #{actor_critic_forward.1} parent=1 // pred_fallthru
      _
    // Predicated region
    $region70: #{actor_critic_forward.1} parent=1 // pred_check
      _
    $region71: #{actor_critic_forward.1} parent=1 // pred_check_branch
      %1204 = sbr.rel (0) target = $region73
    $region72: #{actor_critic_forward.1} parent=1 // pred_region
      _
    $region73: #{actor_critic_forward.1} parent=1 // pred_fallthru
      _
    %1205 = vsyncpa [#allocation3], 1
    %1206 = vsyncpa [#allocation5], 1
    %1207 = vsyncpa [#allocation8], 1

</llo_original>
